<compile_context>
chip_gen: v6e
topology: v6e:2x2x1
jax: 0.10.0
libtpu: 0.0.40
codegen_flags: <defaults>
</compile_context>

<pallas_src>
import jax
import jax.numpy as jnp
from jax.experimental import pallas as pl
from jax.experimental.pallas import tpu as pltpu


def _copy_kernel(x_ref, o_ref):
    # One lane-dense tile resident in VMEM; a single full-vreg vector copy.
    o_ref[...] = x_ref[...]


_MAX_BLOCK_ROWS = 512   # 512 rows x 1024 lanes x 4 B = 2 MiB per f32 block
_SUBLANE_ALIGN = 32     # multiple of every dtype's sublane packing (8/16/32)


def _round_up(a, b):
    return -(-a // b) * b


def identity(x):
    """Pallas TPU implementation of Identity.forward: returns x unchanged.

    Note: the cheapest correct implementation of Identity is simply `return x`
    (no HBM traffic at all); the streaming-copy kernel below is emitted so the
    module's forward is expressed as an actual Pallas kernel, with the output
    aliased onto the input buffer to keep the cost minimal.
    """
    if x.size == 0:
        return x

    orig_shape = x.shape
    n = x.size
    flat = x.reshape(-1)

    # Lane-dense last dim: a wide multiple of 128 gives long runs of unmasked
    # 128-lane vst; fall back to 128 for small arrays to bound padding.
    lanes = 1024 if n >= 8 * 1024 else 128
    rows = pl.cdiv(n, lanes)

    # Sublane/packing-aligned block rows, capped so one block is <= 2 MiB of
    # f32 (x 2 buffers x 2 arrays = ~8 MiB VMEM, inside every chip's default
    # scoped-VMEM limit, including v5e's 16 MiB and v7x's 32 MiB).
    block_rows = min(_MAX_BLOCK_ROWS, _round_up(rows, _SUBLANE_ALIGN))
    padded_rows = _round_up(rows, block_rows)
    padded_n = padded_rows * lanes
    if padded_n != n:
        flat = jnp.pad(flat, (0, padded_n - n))
    x2 = flat.reshape(padded_rows, lanes)

    grid = (padded_rows // block_rows,)

    out = pl.pallas_call(
        _copy_kernel,
        out_shape=jax.ShapeDtypeStruct(x2.shape, x2.dtype),
        grid=grid,
        in_specs=[pl.BlockSpec((block_rows, lanes), lambda i: (i, 0))],
        out_specs=pl.BlockSpec((block_rows, lanes), lambda i: (i, 0)),
        # Output aliases the input buffer; XLA elides the extra allocation/copy
        # whenever the (intermediate) input is dead after this call.
        input_output_aliases={0: 0},
        compiler_params=pltpu.CompilerParams(
            dimension_semantics=("parallel",),  # shard the copy across TCs (v7x)
        ),
    )(x2)

    if padded_n != n:
        out = out.reshape(-1)[:n]
    return out.reshape(orig_shape)


if __name__ == "__main__":
    key = jax.random.PRNGKey(0)
    k1, k2, k3 = jax.random.split(key, 3)

    # (batch, seq, hidden) activation, as Identity is used inside the transformer.
    x = jax.random.normal(k1, (2, 8, 32), jnp.float32)
    out = jax.block_until_ready(identity(x))
    assert out.shape == x.shape and out.dtype == x.dtype, (out.shape, out.dtype)
    assert jnp.array_equal(out, x), float(jnp.max(jnp.abs(out - x)))

    # Larger, 128-divisible tensor: exercises the multi-block streaming grid.
    y = jax.random.normal(k2, (2, 512, 1024), jnp.float32)
    out_y = jax.block_until_ready(identity(y))
    assert out_y.shape == y.shape
    assert jnp.array_equal(out_y, y)

    # Ragged size + sub-32-bit dtype: exercises the padded, lane-dense fallback.
    z = jax.random.normal(k3, (3, 5, 7)).astype(jnp.bfloat16)
    out_z = jax.block_until_ready(identity(z))
    assert out_z.shape == z.shape and out_z.dtype == z.dtype
    assert jnp.array_equal(out_z, z)

    print("KERNEL_OK")
</pallas_src>

<mosaic_0001>
module attributes {stable_mosaic.version = 11 : i64} {
  func.func @_copy_kernel(%arg0: i32, %arg1: memref<32x128xf32, #tpu.memory_space<vmem>>, %arg2: memref<32x128xf32, #tpu.memory_space<vmem>>) attributes {dimension_semantics = [#tpu.dimension_semantics<parallel>], iteration_bounds = array<i64: 1>, scalar_prefetch = 0 : i64, scratch_operands = 0 : i64, tpu.core_type = #tpu.core_type<tc>, window_params = [{transform_indices = @transform_0, window_bounds = array<i64: 32, 128>}, {transform_indices = @transform_1, window_bounds = array<i64: 32, 128>}]} {
    %c0 = arith.constant 0 : index
    %c0_0 = arith.constant 0 : index
    %0 = vector.load %arg1[%c0, %c0_0] : memref<32x128xf32, #tpu.memory_space<vmem>>, vector<32x128xf32>
    %c0_1 = arith.constant 0 : index
    %c0_2 = arith.constant 0 : index
    %1 = vector.load %arg2[%c0_1, %c0_2] : memref<32x128xf32, #tpu.memory_space<vmem>>, vector<32x128xf32>
    tpu.vector_store %arg2[%c0_1, %c0_2], %0 {strides = array<i32>} : memref<32x128xf32, #tpu.memory_space<vmem>>, vector<32x128xf32>,
    return
  }
  func.func @transform_0(%arg0: i32) -> (i32, i32) {
    %c0_i32 = arith.constant 0 : i32
    %c0_i32_0 = arith.constant 0 : i32
    return %arg0, %c0_i32 : i32, i32
  }
  func.func @transform_1(%arg0: i32) -> (i32, i32) {
    %c0_i32 = arith.constant 0 : i32
    %c0_i32_0 = arith.constant 0 : i32
    return %arg0, %c0_i32 : i32, i32
  }
}

</mosaic_0001>

<llo_original>
// kernel: tpu_custom_call.1
$region0: #{tpu_custom_call.1}
  #allocation0 [shape = 'u32[]', space=smem, size = 0x4, offset = 0x4, fixed_abs, tag = 'smem constant byte address 0x4 - core index']
  #allocation1 [shape = 'u32[144,128]{1,0:T(1,128)}', space=vmem, size = 0x12000, scoped, tag = 'internal scratch']
  %s0 = inlined_call_operand.hbm [shape: f32[32,128], index: 0, kind: input, shape index: {}, may-alias: {0,1}]
  %s1 = inlined_call_operand.hbm [shape: f32[32,128], index: 1, kind: output, shape index: {}, may-alias: {0,1}]
  %s2 = sld [smem:[#allocation0]]
  $region18: #{tpu_custom_call.1} parent=0
    _
  %s4 = ssub.s32 1, %s2
  %s5 = scalar_select 0, %s4, %s2
  $region1: #{tpu_custom_call.1} parent=0
    #allocation2 [shape = 'u8[16384]{0}', space=vmem, size = 0x4000, scoped, tag = 'input window, operand 0, single buffered']
    #allocation3 [shape = 's32[1]{0}', space=sflag, size = 0x4, scoped, tag = 'scoped memory for tpu_custom_call.1']
    #allocation4 [shape = 's32[1]{0}', space=sflag, size = 0x4, scoped, tag = 'scoped memory for tpu_custom_call.1']
    #allocation5 [shape = 'u8[16384]{0}', space=vmem, size = 0x4000, scoped, tag = 'output window, operand 0, single buffered']
    %6 = vsyncpa [#allocation3], 0
    %7 = vsyncpa [#allocation4], 0
    // Predicated region
    $region2: #{tpu_custom_call.1} parent=1 // pred_check
      _
    $region3: #{tpu_custom_call.1} parent=1 // pred_check_branch
      %9 = sbr.rel (0) target = $region5
    $region4: #{tpu_custom_call.1} parent=1 // pred_region
      %s11 = ssub.s32 512, 512
      %12 = vsyncadd [#allocation3], %s11
      %s13 = sshll.u32 [#allocation2], 4
      %s14 = int_to_ptr.vmem [resolvable:$true] %s13
      %19 = dma.hbm_to_vmem [thread:$0]  %s0, 512, %s14, [#allocation3], 128, 128, 8
    $region5: #{tpu_custom_call.1} parent=1 // pred_fallthru
      _
    // Predicated region
    $region6: #{tpu_custom_call.1} parent=1 // pred_check
      _
    $region7: #{tpu_custom_call.1} parent=1 // pred_check_branch
      %21 = sbr.rel (0) target = $region9
    $region8: #{tpu_custom_call.1} parent=1 // pred_region
      %22 = dma.done [#allocation3], 512
    $region9: #{tpu_custom_call.1} parent=1 // pred_fallthru
      _
    %v23 = vld [vmem:[#allocation2] sm:$0xff]
    %v24 = vld [vmem:[#allocation2 + $0x8] sm:$0xff]
    %v25 = vld [vmem:[#allocation2 + $0x10] sm:$0xff]
    %v26 = vld [vmem:[#allocation2 + $0x18] sm:$0xff]
    %27 = vst [vmem:[#allocation5] sm:$0xff] %v23
    %28 = vst [vmem:[#allocation5 + $0x8] sm:$0xff] %v24
    %29 = vst [vmem:[#allocation5 + $0x10] sm:$0xff] %v25
    %30 = vst [vmem:[#allocation5 + $0x18] sm:$0xff] %v26
    // Predicated region
    $region10: #{tpu_custom_call.1} parent=1 // pred_check
      _
    $region11: #{tpu_custom_call.1} parent=1 // pred_check_branch
      %32 = sbr.rel (0) target = $region13
    $region12: #{tpu_custom_call.1} parent=1 // pred_region
      %s34 = ssub.s32 512, 512
      %35 = vsyncadd [#allocation4], %s34
      %s36 = sshll.u32 [#allocation5], 4
      %s37 = int_to_ptr.vmem [resolvable:$true] %s36
      %42 = dma.vmem_to_hbm [thread:$0]  %s37, 512, %s1, [#allocation4], 128, 128, 8
    $region13: #{tpu_custom_call.1} parent=1 // pred_fallthru
      _
    // Predicated region
    $region14: #{tpu_custom_call.1} parent=1 // pred_check
      _
    $region15: #{tpu_custom_call.1} parent=1 // pred_check_branch
      %44 = sbr.rel (0) target = $region17
    $region16: #{tpu_custom_call.1} parent=1 // pred_region
      %45 = dma.done [#allocation4], 512
    $region17: #{tpu_custom_call.1} parent=1 // pred_fallthru
      _
    %46 = vsyncpa [#allocation3], 1
    %47 = vsyncpa [#allocation4], 1

</llo_original>
